<compile_context>
chip_gen: v6e
topology: v6e:2x2x1
jax: 0.10.0
libtpu: 0.0.40
codegen_flags: <defaults>
</compile_context>

<pallas_src>
import functools

import jax
import jax.numpy as jnp
from jax.experimental import pallas as pl
from jax.experimental.pallas import tpu as pltpu


def _round_up(x, m):
    return ((x + m - 1) // m) * m


def _center_loss_kernel(labels_ref, feats_ref, centers_ref, out_ref, acc_ref,
                        *, inv_count, num_classes):
    # labels_ref : VMEM (TB, 1)  int32 — labels for this batch tile (-1 => padding row)
    # feats_ref  : VMEM (TB, D)         — batch tile of features
    # centers_ref: VMEM (C, D)          — full centers table, resident across the grid
    # out_ref    : VMEM (1, 1)  f32     — final scalar loss (written on last step only)
    # acc_ref    : VMEM (TB, D) f32     — lane-dense running sum of squared diffs
    i = pl.program_id(0)
    tb = feats_ref.shape[0]

    @pl.when(i == 0)
    def _():
        acc_ref[...] = jnp.zeros_like(acc_ref)

    # In-kernel embedding gather via one-hot matmul on the MXU.
    labels_tile = labels_ref[...]                                          # (TB, 1) int32
    class_ids = jax.lax.broadcasted_iota(jnp.int32, (tb, num_classes), 1)  # (TB, C)
    one_hot = (labels_tile == class_ids).astype(jnp.float32)               # (TB, C)
    gathered = jnp.dot(one_hot, centers_ref[...].astype(jnp.float32),
                       preferred_element_type=jnp.float32)                 # (TB, D)

    diff = feats_ref[...].astype(jnp.float32) - gathered
    acc_ref[...] += diff * diff                                            # VPU-only hot loop

    @pl.when(i == pl.num_programs(0) - 1)
    def _():
        # Single cross-lane reduce + scale, outside the hot loop.
        out_ref[...] = jnp.sum(acc_ref[...], keepdims=True) * inv_count


def center_loss(feats, labels, centers, *, block_b=512):
    """Pallas CenterLoss forward. Returns a scalar f32 loss (MSE mean reduction)."""
    # reshape(-1) rather than squeeze(): robust to (B, 1) labels with B == 1.
    labels = labels.reshape(-1).astype(jnp.int32)
    B, D = feats.shape
    C = centers.shape[0]

    # Batch tile: multiple of 8, capped at block_b.
    tb = min(block_b, _round_up(B, 8))
    tb = max(8, (tb // 8) * 8)
    Bp = _round_up(B, tb)

    pad = Bp - B
    if pad:
        feats = jnp.pad(feats, ((0, pad), (0, 0)))
        # -1 matches no class -> one-hot row is all zeros -> padded rows contribute 0.
        labels = jnp.pad(labels, (0, pad), constant_values=-1)
    labels2d = labels.reshape(Bp, 1)

    inv_count = 1.0 / float(B * D)  # MSELoss(reduction='mean') over ORIGINAL elements
    kernel = functools.partial(
        _center_loss_kernel, inv_count=inv_count, num_classes=C)

    grid = (Bp // tb,)
    out = pl.pallas_call(
        kernel,
        out_shape=jax.ShapeDtypeStruct((1, 1), jnp.float32),
        grid_spec=pltpu.PrefetchScalarGridSpec(
            num_scalar_prefetch=0,
            grid=grid,
            in_specs=[
                # labels for batch tile i
                pl.BlockSpec((tb, 1), lambda i: (i, 0)),
                # feats batch tile i
                pl.BlockSpec((tb, D), lambda i: (i, 0)),
                # centers: full table, same block every step (VMEM-resident)
                pl.BlockSpec((C, D), lambda i: (0, 0)),
            ],
            out_specs=pl.BlockSpec((1, 1), lambda i: (0, 0)),
            scratch_shapes=[pltpu.VMEM((tb, D), jnp.float32)],
        ),
        compiler_params=pltpu.CompilerParams(
            dimension_semantics=("arbitrary",),  # batch axis is a reduction
        ),
        cost_estimate=pl.CostEstimate(
            flops=2 * Bp * C * D + 3 * Bp * D,
            transcendentals=0,
            bytes_accessed=Bp * D * 4 + C * D * 4 + Bp * 4 + 4,
        ),
    )(labels2d, feats, centers)
    return out[0, 0]


if __name__ == "__main__":
    num_classes = 10
    feature_dim = 32
    batch = 8

    key = jax.random.PRNGKey(0)
    k_feats, k_labels, k_centers = jax.random.split(key, 3)

    feats = jax.random.normal(k_feats, (batch, feature_dim), dtype=jnp.float32)
    # labels given as (B, 1) to exercise the .squeeze() semantics
    labels = jax.random.randint(k_labels, (batch, 1), 0, num_classes, dtype=jnp.int32)
    # nn.Embedding default init: N(0, 1)
    centers = jax.random.normal(k_centers, (num_classes, feature_dim), dtype=jnp.float32)

    loss = center_loss(feats, labels, centers)
    loss = jax.block_until_ready(loss)

    # Pure-JAX reference check
    ref = jnp.mean((feats - centers[jnp.squeeze(labels)]) ** 2)
    assert jnp.allclose(loss, ref, rtol=1e-5, atol=1e-6), (loss, ref)

    print("KERNEL_OK")
</pallas_src>

<mosaic_0001>
module attributes {stable_mosaic.version = 11 : i64} {
  func.func @_center_loss_kernel(%arg0: i32, %arg1: memref<8x1xi32, #tpu.memory_space<vmem>>, %arg2: memref<8x32xf32, #tpu.memory_space<vmem>>, %arg3: memref<10x32xf32, #tpu.memory_space<vmem>>, %arg4: memref<1x1xf32, #tpu.memory_space<vmem>>, %arg5: memref<8x32xf32, #tpu.memory_space<vmem>>) attributes {dimension_semantics = [#tpu.dimension_semantics<arbitrary>], iteration_bounds = array<i64: 1>, scalar_prefetch = 0 : i64, scratch_operands = 1 : i64, tpu.core_type = #tpu.core_type<tc>, window_params = [{transform_indices = @transform_0, window_bounds = array<i64: 8, 1>}, {transform_indices = @transform_1, window_bounds = array<i64: 8, 32>}, {pipeline_mode = #tpu.pipeline_mode<synchronous>, transform_indices = @transform_2, window_bounds = array<i64: 10, 32>}, {pipeline_mode = #tpu.pipeline_mode<synchronous>, transform_indices = @transform_3, window_bounds = array<i64: 1, 1>}]} {
    %c0_i32 = arith.constant 0 : i32
    %0 = arith.cmpi eq, %arg0, %c0_i32 : i32
    %1 = arith.extui %0 : i1 to i32
    %c0_i32_0 = arith.constant 0 : i32
    %2 = arith.cmpi ne, %1, %c0_i32_0 : i32
    scf.if %2 {
      %cst_12 = arith.constant 0.000000e+00 : f32
      %20 = vector.broadcast %cst_12 : f32 to vector<8x32xf32>
      %c0_13 = arith.constant 0 : index
      %c0_14 = arith.constant 0 : index
      %21 = vector.load %arg5[%c0_13, %c0_14] : memref<8x32xf32, #tpu.memory_space<vmem>>, vector<8x32xf32>
      tpu.vector_store %arg5[%c0_13, %c0_14], %20 {strides = array<i32>} : memref<8x32xf32, #tpu.memory_space<vmem>>, vector<8x32xf32>,
    } else {
    }
    %c0 = arith.constant 0 : index
    %c0_1 = arith.constant 0 : index
    %3 = vector.load %arg1[%c0, %c0_1] : memref<8x1xi32, #tpu.memory_space<vmem>>, vector<8x1xi32>
    %4 = tpu.iota {dimensions = array<i32: 1>} : vector<8x10xi32>
    %5 = vector.broadcast %3 : vector<8x1xi32> to vector<8x10xi32>
    %6 = arith.cmpi eq, %5, %4 : vector<8x10xi32>
    %7 = arith.extui %6 : vector<8x10xi1> to vector<8x10xi32>
    %8 = arith.sitofp %7 : vector<8x10xi32> to vector<8x10xf32>
    %c0_2 = arith.constant 0 : index
    %c0_3 = arith.constant 0 : index
    %9 = vector.load %arg3[%c0_2, %c0_3] : memref<10x32xf32, #tpu.memory_space<vmem>>, vector<10x32xf32>
    %cst = arith.constant dense<0.000000e+00> : vector<8x32xf32>
    %10 = tpu.matmul %8, %9, %cst {dimension_numbers = #tpu.dot_dimension_numbers<[1], [0], [0], [1], [0, 0, 1, 1], [], []>} : vector<8x10xf32>, vector<10x32xf32>, vector<8x32xf32> -> vector<8x32xf32>
    %c0_4 = arith.constant 0 : index
    %c0_5 = arith.constant 0 : index
    %11 = vector.load %arg2[%c0_4, %c0_5] : memref<8x32xf32, #tpu.memory_space<vmem>>, vector<8x32xf32>
    %12 = arith.subf %11, %10 : vector<8x32xf32>
    %c0_6 = arith.constant 0 : index
    %c0_7 = arith.constant 0 : index
    %13 = vector.load %arg5[%c0_6, %c0_7] : memref<8x32xf32, #tpu.memory_space<vmem>>, vector<8x32xf32>
    %14 = arith.mulf %12, %12 : vector<8x32xf32>
    %15 = arith.addf %13, %14 : vector<8x32xf32>
    %c0_8 = arith.constant 0 : index
    %c0_9 = arith.constant 0 : index
    %16 = vector.load %arg5[%c0_8, %c0_9] : memref<8x32xf32, #tpu.memory_space<vmem>>, vector<8x32xf32>
    tpu.vector_store %arg5[%c0_8, %c0_9], %15 {strides = array<i32>} : memref<8x32xf32, #tpu.memory_space<vmem>>, vector<8x32xf32>,
    %c0_i32_10 = arith.constant 0 : i32
    %17 = arith.cmpi eq, %arg0, %c0_i32_10 : i32
    %18 = arith.extui %17 : i1 to i32
    %c0_i32_11 = arith.constant 0 : i32
    %19 = arith.cmpi ne, %18, %c0_i32_11 : i32
    scf.if %19 {
      %c0_12 = arith.constant 0 : index
      %c0_13 = arith.constant 0 : index
      %20 = vector.load %arg5[%c0_12, %c0_13] : memref<8x32xf32, #tpu.memory_space<vmem>>, vector<8x32xf32>
      %21 = vector.shape_cast %20 : vector<8x32xf32> to vector<1x8x32xf32>
      %cst_14 = arith.constant dense<0.000000e+00> : vector<1xf32>
      %22 = vector.multi_reduction <add>, %21, %cst_14 [1, 2] : vector<1x8x32xf32> to vector<1xf32>
      %23 = vector.shape_cast %22 : vector<1xf32> to vector<1x1x1xf32>
      %24 = vector.extract %23[0, 0, 0] : f32 from vector<1x1x1xf32>
      %25 = vector.broadcast %24 : f32 to vector<1x1xf32>
      %cst_15 = arith.constant 3.906250e-03 : f32
      %26 = vector.broadcast %cst_15 : f32 to vector<1x1xf32>
      %27 = arith.mulf %25, %26 : vector<1x1xf32>
      %c0_16 = arith.constant 0 : index
      %c0_17 = arith.constant 0 : index
      %28 = vector.load %arg4[%c0_16, %c0_17] : memref<1x1xf32, #tpu.memory_space<vmem>>, vector<1x1xf32>
      tpu.vector_store %arg4[%c0_16, %c0_17], %27 {strides = array<i32>} : memref<1x1xf32, #tpu.memory_space<vmem>>, vector<1x1xf32>,
    } else {
    }
    return
  }
  func.func @transform_0(%arg0: i32) -> (i32, i32) {
    %c0_i32 = arith.constant 0 : i32
    %c0_i32_0 = arith.constant 0 : i32
    return %arg0, %c0_i32 : i32, i32
  }
  func.func @transform_1(%arg0: i32) -> (i32, i32) {
    %c0_i32 = arith.constant 0 : i32
    %c0_i32_0 = arith.constant 0 : i32
    return %arg0, %c0_i32 : i32, i32
  }
  func.func @transform_2(%arg0: i32) -> (i32, i32) {
    %c0_i32 = arith.constant 0 : i32
    %c0_i32_0 = arith.constant 0 : i32
    %c0_i32_1 = arith.constant 0 : i32
    return %c0_i32, %c0_i32_0 : i32, i32
  }
  func.func @transform_3(%arg0: i32) -> (i32, i32) {
    %c0_i32 = arith.constant 0 : i32
    %c0_i32_0 = arith.constant 0 : i32
    %c0_i32_1 = arith.constant 0 : i32
    return %c0_i32, %c0_i32_0 : i32, i32
  }
}

</mosaic_0001>

<llo_original>
// kernel: tpu_custom_call.1
$region0: #{tpu_custom_call.1}
  #allocation0 [shape = 'u32[]', space=smem, size = 0x4, offset = 0x4, fixed_abs, tag = 'smem constant byte address 0x4 - core index']
  #allocation1 [shape = 'u32[144,128]{1,0:T(1,128)}', space=vmem, size = 0x12000, scoped, tag = 'internal scratch']
  #allocation2 [shape = 'f32[8,32]{1,0:T(8,128)}', space=vmem, size = 0x1000, scoped, tag = 'scratch operand']
  %s0 = inlined_call_operand.vmem [shape: s32[8,1], index: 0, kind: input, shape index: {}]
  %s1 = inlined_call_operand.vmem [shape: f32[8,32], index: 1, kind: input, shape index: {}]
  %s2 = inlined_call_operand.hbm [shape: f32[10,32], index: 2, kind: input, shape index: {}]
  %s3 = inlined_call_operand.hbm [shape: f32[1,1], index: 3, kind: output, shape index: {}]
  %s4 = sld [smem:[#allocation0]]
  $region34: #{tpu_custom_call.1} parent=0
    _
  %s6 = ssub.s32 1, %s4
  %s7 = scalar_select 0, %s6, %s4
  $region1: #{tpu_custom_call.1} parent=0
    #allocation3 [shape = 'u8[8192]{0}', space=vmem, size = 0x2000, scoped, tag = 'input window, operand 2, single buffered']
    #allocation4 [shape = 's32[1]{0}', space=sflag, size = 0x4, scoped, tag = 'scoped memory for tpu_custom_call.1']
    #allocation5 [shape = 's32[1]{0}', space=sflag, size = 0x4, scoped, tag = 'scoped memory for tpu_custom_call.1']
    #allocation6 [shape = 'u8[512]{0}', space=vmem, size = 0x400, scoped, tag = 'output window, operand 0, single buffered']
    %8 = vsyncpa [#allocation4], 0
    %9 = vsyncpa [#allocation5], 0
    // Predicated region
    $region2: #{tpu_custom_call.1} parent=1 // pred_check
      _
    $region3: #{tpu_custom_call.1} parent=1 // pred_check_branch
      %11 = sbr.rel (0) target = $region5
    $region4: #{tpu_custom_call.1} parent=1 // pred_region
      _
    $region5: #{tpu_custom_call.1} parent=1 // pred_fallthru
      _
    // Predicated region
    $region6: #{tpu_custom_call.1} parent=1 // pred_check
      _
    $region7: #{tpu_custom_call.1} parent=1 // pred_check_branch
      %13 = sbr.rel (0) target = $region9
    $region8: #{tpu_custom_call.1} parent=1 // pred_region
      _
    $region9: #{tpu_custom_call.1} parent=1 // pred_fallthru
      _
    // Predicated region
    $region10: #{tpu_custom_call.1} parent=1 // pred_check
      _
    $region11: #{tpu_custom_call.1} parent=1 // pred_check_branch
      %15 = sbr.rel (0) target = $region13
    $region12: #{tpu_custom_call.1} parent=1 // pred_region
      %s17 = ssub.s32 256, 256
      %18 = vsyncadd [#allocation4], %s17
      %s19 = sshll.u32 [#allocation3], 4
      %s20 = int_to_ptr.vmem [resolvable:$true] %s19
      %25 = dma.hbm_to_vmem [thread:$0]  %s2, 256, %s20, [#allocation4], 128, 128, 8
    $region13: #{tpu_custom_call.1} parent=1 // pred_fallthru
      _
    // Predicated region
    $region14: #{tpu_custom_call.1} parent=1 // pred_check
      _
    $region15: #{tpu_custom_call.1} parent=1 // pred_check_branch
      %27 = sbr.rel (0) target = $region17
    $region16: #{tpu_custom_call.1} parent=1 // pred_region
      %28 = dma.done [#allocation4], 256
    $region17: #{tpu_custom_call.1} parent=1 // pred_fallthru
      _
    %p29 = scmp.eq.s32.totalorder 0, 0
    // Predicated region
    $region18: #{tpu_custom_call.1} parent=1 // pred_check
      %p30 = pneg %p29
    $region19: #{tpu_custom_call.1} parent=1 // pred_check_branch
      %32 = sbr.rel (%p30) target = $region21
    $region20: #{tpu_custom_call.1} parent=1 // pred_region
      %vm33 = vcmask 261120
      %34 = vst.msk [vmem:[#allocation2] sm:$0xff] %vm33, 0.0
    $region21: #{tpu_custom_call.1} parent=1 // pred_fallthru
      _
    %v35 = vld [vmem:[%s0] sm:$0xff]
    %v36 = vlaneseq
    %v37 = vand.u32 %v36, 127
    %38 = vset.pattern.permute.xlu0 0
    %39 = vperm.xlu0 %38, %v35
    %v40 = vpop.permute.xlu0 %39
    %vm41 = vcmp.eq.s32.totalorder %v40, %v37
    %v42 = vsel %vm41, 1, 0
    %v43 = vcvt.s32.f32 %v42
    %v44 = vld [vmem:[#allocation3] sm:$0xff]
    %v45 = vld [vmem:[#allocation3 + $0x8] sm:$0x3]
    %vm46 = vcmask 80896
    %v48 = vsel %vm46, %v43, 0
    %vm50 = vcmask 1041408
    %v52 = vsel %vm50, %v45, 0
    %54 = vmatprep.subr.mxu0 0.0
    %55 = vmatpush1.msra.mxu0 0.0
    %56 = vmatprep.subr.mxu0 0.0
    %57 = vmatpush1.msra.mxu0 0.0
    %58 = vmatprep.subr.mxu0 0.0
    %59 = vmatpush1.msra.mxu0 0.0
    %60 = vmatprep.subr.mxu0 0.0
    %61 = vmatpush1.msra.mxu0 0.0
    %62 = vmatprep.subr.mxu0 0.0
    %63 = vmatpush1.msra.mxu0 0.0
    %64 = vmatprep.subr.mxu0 0.0
    %65 = vmatpush1.msra.mxu0 0.0
    %66 = vmatprep.subr.mxu0 0.0
    %67 = vmatpush1.msra.mxu0 0.0
    %68 = vmatprep.subr.mxu0 0.0
    %69 = vmatpush1.msra.mxu0 0.0
    %70 = vmatprep.subr.mxu0 0.0
    %71 = vmatpush1.msra.mxu0 0.0
    %72 = vmatprep.subr.mxu0 0.0
    %73 = vmatpush1.msra.mxu0 0.0
    %74 = vmatprep.subr.mxu0 0.0
    %75 = vmatpush1.msra.mxu0 0.0
    %76 = vmatprep.subr.mxu0 0.0
    %77 = vmatpush1.msra.mxu0 0.0
    %78 = vmatprep.subr.mxu0 0.0
    %79 = vmatpush1.msra.mxu0 0.0
    %80 = vmatprep.subr.mxu0 0.0
    %81 = vmatpush1.msra.mxu0 0.0
    %82 = vmatprep.subr.mxu0 0.0
    %83 = vmatpush1.msra.mxu0 %v52
    %84 = vmatprep.subr.mxu0 0.0
    %85 = vmatpush1.msra.mxu0 %v44
    %86 = vmatprep.subr.mxu0 0.0
    %87 = vmatpush2.msra.mxu0 0.0
    %88 = vmatprep.subr.mxu0 0.0
    %89 = vmatpush2.msra.mxu0 0.0
    %90 = vmatprep.subr.mxu0 0.0
    %91 = vmatpush2.msra.mxu0 0.0
    %92 = vmatprep.subr.mxu0 0.0
    %93 = vmatpush2.msra.mxu0 0.0
    %94 = vmatprep.subr.mxu0 0.0
    %95 = vmatpush2.msra.mxu0 0.0
    %96 = vmatprep.subr.mxu0 0.0
    %97 = vmatpush2.msra.mxu0 0.0
    %98 = vmatprep.subr.mxu0 0.0
    %99 = vmatpush2.msra.mxu0 0.0
    %100 = vmatprep.subr.mxu0 0.0
    %101 = vmatpush2.msra.mxu0 0.0
    %102 = vmatprep.subr.mxu0 0.0
    %103 = vmatpush2.msra.mxu0 0.0
    %104 = vmatprep.subr.mxu0 0.0
    %105 = vmatpush2.msra.mxu0 0.0
    %106 = vmatprep.subr.mxu0 0.0
    %107 = vmatpush2.msra.mxu0 0.0
    %108 = vmatprep.subr.mxu0 0.0
    %109 = vmatpush2.msra.mxu0 0.0
    %110 = vmatprep.subr.mxu0 0.0
    %111 = vmatpush2.msra.mxu0 0.0
    %112 = vmatprep.subr.mxu0 0.0
    %113 = vmatpush2.msra.mxu0 0.0
    %114 = vmatprep.subr.mxu0 0.0
    %115 = vmatpush2.msra.mxu0 0.0
    %116 = vmatprep.subr.mxu0 0.0
    %117 = vmatpush2.msra.mxu0 0.0
    %118 = vmatprep.mubr.f32.mxu0 0.0
    %119 = vmatmul.mubr.f32.gmra.mxu0 %v48
    %v120 = vpop.f32.mrf.mxu0
    %v121 = vadd.f32 0.0, %v120
    %v122 = vpop.f32.mrf.mxu0
    %123 = vdwg.mxu0
    %v124 = vld [vmem:[%s1] sm:$0xff]
    %v125 = vsub.f32 %v124, %v121
    %v126 = vld [vmem:[#allocation2] sm:$0xff]
    %v127 = vmul.f32 %v125, %v125
    %v128 = vadd.f32 %v126, %v127
    %vm129 = vcmask 261120
    %130 = vst.msk [vmem:[#allocation2] sm:$0xff] %vm129, %v128
    // Predicated region
    $region22: #{tpu_custom_call.1} parent=1 // pred_check
      %p131 = pneg %p29
    $region23: #{tpu_custom_call.1} parent=1 // pred_check_branch
      %133 = sbr.rel (%p131) target = $region25
    $region24: #{tpu_custom_call.1} parent=1 // pred_region
      %v134 = vld [vmem:[#allocation2] sm:$0xff]
      %v135 = vsel %vm129, %v134, 0.0
      %136 = vadd.xlane.f32.xlu0 %v135
      %v137 = vpop.xlane.xlu0 %136
      %v138 = vrot.slane %v137, 4
      %v139 = vadd.f32 %v137, %v138
      %v140 = vrot.slane %v139, 2
      %v141 = vadd.f32 %v139, %v140
      %v142 = vrot.slane %v141, 1
      %v143 = vadd.f32 %v141, %v142
      %s144 = vtos %v143
      %v145 = vstv %s144
      %v146 = vmul.f32 %v145, 0.00390625
      %vm147 = vcmask 0
      %148 = vst.msk [vmem:[#allocation6] sm:$0x1] %vm147, %v146
    $region25: #{tpu_custom_call.1} parent=1 // pred_fallthru
      _
    // Predicated region
    $region26: #{tpu_custom_call.1} parent=1 // pred_check
      _
    $region27: #{tpu_custom_call.1} parent=1 // pred_check_branch
      %150 = sbr.rel (0) target = $region29
    $region28: #{tpu_custom_call.1} parent=1 // pred_region
      %s152 = ssub.s32 16, 16
      %153 = vsyncadd [#allocation5], %s152
      %s155 = sshll.u32 [#allocation6], 4
      %s156 = int_to_ptr.vmem [resolvable:$true] %s155
      %158 = dma.vmem_to_hbm [thread:$0]  %s156, 16, %s3, [#allocation5]
    $region29: #{tpu_custom_call.1} parent=1 // pred_fallthru
      _
    // Predicated region
    $region30: #{tpu_custom_call.1} parent=1 // pred_check
      _
    $region31: #{tpu_custom_call.1} parent=1 // pred_check_branch
      %160 = sbr.rel (0) target = $region33
    $region32: #{tpu_custom_call.1} parent=1 // pred_region
      %161 = dma.done [#allocation5], 16
    $region33: #{tpu_custom_call.1} parent=1 // pred_fallthru
      _
    %162 = vsyncpa [#allocation4], 1
    %163 = vsyncpa [#allocation5], 1

</llo_original>
